<compile_context>
chip_gen: v6e
topology: v6e:2x2x1
jax: 0.10.0
libtpu: 0.0.40
codegen_flags: <defaults>
</compile_context>

<pallas_src>
import functools
import numpy as np
import jax
import jax.numpy as jnp
from jax.experimental import pallas as pl
from jax.experimental.pallas import tpu as pltpu


# ----------------------------- static filter taps ----------------------------
def _gaussian_taps_1d(sigma: float = 1.0, size: int = 5):
    x = np.arange(size, dtype=np.float64) - (size - 1) / 2.0
    g = np.exp(-(x ** 2) / (2.0 * sigma ** 2))
    g = g / g.sum()
    return [float(v) for v in g]


_G1D = _gaussian_taps_1d(1.0, 5)          # outer(_G1D,_G1D) == 5x5 Gaussian
_TAN225 = float(np.tan(np.deg2rad(22.5)))
_TAN675 = float(np.tan(np.deg2rad(67.5)))


def _round_up(x: int, m: int) -> int:
    return ((x + m - 1) // m) * m


# ------------------------- register-level shift helpers -----------------------
def _shift_rows(v, s):
    """result[r, :] = v[r - s, :], zero-filled at the boundary (no wrap)."""
    if s == 0:
        return v
    n, c = v.shape
    z = jnp.zeros((abs(s), c), v.dtype)
    if s > 0:
        return jnp.concatenate([z, v[: n - s, :]], axis=0)
    return jnp.concatenate([v[-s:, :], z], axis=0)


def _shift_lanes(v, s):
    """result[:, c] = v[:, c - s] via XLU lane rotation.

    Wrap-around only ever crosses the zero gutters / dead 128-pad lanes, never
    valid image data (every plane keeps a 2-lane zero gutter on each side)."""
    if s == 0:
        return v
    return pltpu.roll(v, s % v.shape[1], axis=1)


# --------------------------------- kernel ------------------------------------
def canny_kernel(x_ref, o_ref, *, P, H, W, S, CW, low2, high2):
    """x_ref: (1, H+4, CW) framed/lane-packed input; o_ref: (1, H, CW).

    Plane p occupies lanes [p*S+2, p*S+2+W), valid rows are [2, 2+H); all
    frame rows, gutters and 128-pad lanes arrive as zeros from the wrapper.
    Every stage works on full (H+4, CW) lane-aligned tiles; per-stage zero
    "same" padding is enforced with one hoisted validity mask.
    """
    H4 = H + 4
    x = x_ref[0]                                            # (H4, CW)

    # Hoisted validity mask (computed once, reused by every stage).
    row = jax.lax.broadcasted_iota(jnp.int32, (H4, CW), 0)
    col = jax.lax.broadcasted_iota(jnp.int32, (H4, CW), 1)
    colmask = (col >= 2) & (col < 2 + W)
    for p in range(1, P):
        colmask = colmask | ((col >= p * S + 2) & (col < p * S + 2 + W))
    valid = colmask & (row >= 2) & (row < 2 + H)

    # ---- separable 5-tap Gaussian blur (zero "same" padding) ----
    tv = (_G1D[2] * x
          + _G1D[1] * (_shift_rows(x, 1) + _shift_rows(x, -1))
          + _G1D[0] * (_shift_rows(x, 2) + _shift_rows(x, -2)))
    blur = (_G1D[2] * tv
            + _G1D[1] * (_shift_lanes(tv, 1) + _shift_lanes(tv, -1))
            + _G1D[0] * (_shift_lanes(tv, 2) + _shift_lanes(tv, -2)))
    blur = jnp.where(valid, blur, 0.0)          # zero halo for the Sobel conv

    # ---- separable Sobel: gx = diff_x(smooth_y), gy = smooth_x(diff_y) ----
    up1 = _shift_rows(blur, 1)                  # blur[r-1, c]
    dn1 = _shift_rows(blur, -1)                 # blur[r+1, c]
    sy = up1 + 2.0 * blur + dn1
    dy = dn1 - up1
    gx = _shift_lanes(sy, -1) - _shift_lanes(sy, 1)           # sy[c+1]-sy[c-1]
    gy = _shift_lanes(dy, 1) + 2.0 * dy + _shift_lanes(dy, -1)

    # Squared gradient magnitude (sqrt dropped; thresholds are pre-squared,
    # all downstream compares are monotone on non-negative values).
    mag2 = jnp.where(valid, gx * gx + gy * gy, 0.0)

    # ---- non-maximum suppression (4-bin direction quantization) ----
    ax, ay = jnp.abs(gx), jnp.abs(gy)
    bin0 = ay <= _TAN225 * ax                    # ~0 deg   -> left/right
    bin90 = ay > _TAN675 * ax                    # ~90 deg  -> up/down
    diag45 = jnp.logical_not(bin0) & jnp.logical_not(bin90) & (gx * gy > 0.0)

    m_up = _shift_rows(mag2, 1)                  # mag2[r-1, c]
    m_dn = _shift_rows(mag2, -1)                 # mag2[r+1, c]
    # Sequential select chains (neighbors consumed as produced to limit the
    # number of simultaneously-live full-width temporaries).
    n1 = jnp.where(bin0, _shift_lanes(mag2, 1),
         jnp.where(bin90, m_up,
         jnp.where(diag45, _shift_lanes(m_dn, 1), _shift_lanes(m_up, 1))))
    n2 = jnp.where(bin0, _shift_lanes(mag2, -1),
         jnp.where(bin90, m_dn,
         jnp.where(diag45, _shift_lanes(m_up, -1), _shift_lanes(m_dn, -1))))
    nms2 = jnp.where((mag2 >= n1) & (mag2 >= n2), mag2, 0.0)

    # ---- hysteresis (single-pass 8-neighbor connection), all in registers ----
    strong = nms2 >= high2
    sf = jnp.where(valid & strong, 1.0, 0.0)     # zero-halo strong map
    s_up = _shift_rows(sf, 1)
    s_dn = _shift_rows(sf, -1)
    nb = jnp.maximum(s_up, s_dn)
    nb = jnp.maximum(nb, _shift_lanes(sf, 1))
    nb = jnp.maximum(nb, _shift_lanes(sf, -1))
    nb = jnp.maximum(nb, _shift_lanes(s_up, 1))
    nb = jnp.maximum(nb, _shift_lanes(s_up, -1))
    nb = jnp.maximum(nb, _shift_lanes(s_dn, 1))
    nb = jnp.maximum(nb, _shift_lanes(s_dn, -1))

    weak = (nms2 >= low2) & jnp.logical_not(strong)
    edges = jnp.where(strong | (weak & (nb > 0.0)), 1.0, 0.0)

    # Single lane-dense output store of the H valid rows.
    o_ref[0] = edges[2:2 + H, :].astype(o_ref.dtype)


# ------------------------------- plan / wrapper -------------------------------
def _plan(nc: int, h: int, w: int):
    """Plane batch per grid step + generation-aware VMEM limit."""
    s = w + 4
    h4 = h + 4
    try:
        cap = int(pltpu.get_tpu_info().vmem_capacity_bytes)
    except Exception:
        cap = 64 * 1024 * 1024                 # conservative (v7x-sized) fallback
    # Stay well below physical VMEM (v7x: 64 MiB total; v6e/v5e: 128 MiB).
    vmem_limit = min(int(cap * 0.8), 100 * 1024 * 1024)
    budget = int(vmem_limit * 0.6)

    def footprint(p):
        c = _round_up(p * s, 128)
        # double-buffered in/out blocks + ~10 live full-width f32 temporaries.
        return 4 * c * (2 * 2 * h4 + 2 * 2 * h + 10 * h4)

    divisors = [d for d in range(1, nc + 1) if nc % d == 0]
    fitting = [d for d in divisors if footprint(d) <= budget] or [1]
    # Prefer packed widths that are natively 128-aligned and >= 512 lanes;
    # otherwise take the largest fitting batch (dead zero lanes pad to 128).
    aligned = [d for d in fitting if (d * s) % 128 == 0 and d * s >= 512]
    p = max(aligned) if aligned else max(fitting)
    return p, vmem_limit


@functools.partial(jax.jit, static_argnums=(1, 2))
def canny_edge_detector(image, low_threshold: float = 0.1,
                        high_threshold: float = 0.2):
    """image: (N, C, H, W) float -> binary edge map (N, C, H, W) float32."""
    N, C, H, W = image.shape
    NC = N * C
    H4, S = H + 4, W + 4

    P, vmem_limit = _plan(NC, H, W)
    grid = NC // P
    CW = _round_up(P * S, 128)

    # Wrapper-side lane-dense packing (layout plumbing, not kernel work):
    # plane p of grid step g sits at rows [2, 2+H), lanes [p*S+2, p*S+2+W),
    # with the zero frame / gutters / 128-pad lanes baked in.
    x = image.reshape(NC, H, W).astype(jnp.float32)
    xp = jnp.pad(x, ((0, 0), (2, 2), (2, 2)))                      # (NC, H4, S)
    xp = xp.reshape(grid, P, H4, S).transpose(0, 2, 1, 3).reshape(grid, H4, P * S)
    if CW > P * S:
        xp = jnp.pad(xp, ((0, 0), (0, 0), (0, CW - P * S)))        # dead zero lanes

    kern = functools.partial(
        canny_kernel, P=P, H=H, W=W, S=S, CW=CW,
        low2=float(low_threshold) ** 2,       # compares run on squared magnitude
        high2=float(high_threshold) ** 2)

    out_packed = pl.pallas_call(
        kern,
        out_shape=jax.ShapeDtypeStruct((grid, H, CW), jnp.float32),
        grid_spec=pltpu.PrefetchScalarGridSpec(
            num_scalar_prefetch=0,
            grid=(grid,),
            in_specs=[pl.BlockSpec((1, H4, CW), lambda i: (i, 0, 0))],
            out_specs=pl.BlockSpec((1, H, CW), lambda i: (i, 0, 0)),
        ),
        compiler_params=pltpu.CompilerParams(
            dimension_semantics=("parallel",),
            vmem_limit_bytes=vmem_limit,
        ),
    )(xp)

    # Strided unpack of the lane-packed output back to (N, C, H, W).
    out = out_packed[:, :, : P * S].reshape(grid, H, P, S)
    out = out.transpose(0, 2, 1, 3)[:, :, :, 2:2 + W]
    return out.reshape(N, C, H, W)


if __name__ == "__main__":
    key = jax.random.PRNGKey(0)
    x = jax.random.uniform(key, (2, 4, 16, 16), dtype=jnp.float32)
    y = canny_edge_detector(x, 0.1, 0.2)
    jax.block_until_ready(y)
    assert y.shape == (2, 4, 16, 16) and y.dtype == jnp.float32
    assert bool(jnp.all((y == 0.0) | (y == 1.0)))
    print("KERNEL_OK")
</pallas_src>

<mosaic_0001>
module attributes {stable_mosaic.version = 11 : i64} {
  func.func @canny_kernel(%arg0: i32, %arg1: memref<1x20x256xf32, #tpu.memory_space<vmem>>, %arg2: memref<1x16x256xf32, #tpu.memory_space<vmem>>) attributes {dimension_semantics = [#tpu.dimension_semantics<parallel>], iteration_bounds = array<i64: 1>, scalar_prefetch = 0 : i64, scratch_operands = 0 : i64, tpu.core_type = #tpu.core_type<tc>, window_params = [{transform_indices = @transform_0, window_bounds = array<i64: 1, 20, 256>}, {transform_indices = @transform_1, window_bounds = array<i64: 1, 16, 256>}]} {
    %c0 = arith.constant 0 : index
    %c0_0 = arith.constant 0 : index
    %c0_1 = arith.constant 0 : index
    %0 = vector.load %arg1[%c0, %c0_0, %c0_1] : memref<1x20x256xf32, #tpu.memory_space<vmem>>, vector<1x20x256xf32>
    %1 = vector.shape_cast %0 : vector<1x20x256xf32> to vector<20x256xf32>
    %2 = tpu.iota {dimensions = array<i32: 0>} : vector<20x256xi32>
    %3 = tpu.iota {dimensions = array<i32: 1>} : vector<20x256xi32>
    %c2_i32 = arith.constant 2 : i32
    %4 = vector.broadcast %c2_i32 : i32 to vector<20x256xi32>
    %5 = arith.cmpi sge, %3, %4 : vector<20x256xi32>
    %c18_i32 = arith.constant 18 : i32
    %6 = vector.broadcast %c18_i32 : i32 to vector<20x256xi32>
    %7 = arith.cmpi slt, %3, %6 : vector<20x256xi32>
    %8 = arith.andi %5, %7 : vector<20x256xi1>
    %c22_i32 = arith.constant 22 : i32
    %9 = vector.broadcast %c22_i32 : i32 to vector<20x256xi32>
    %10 = arith.cmpi sge, %3, %9 : vector<20x256xi32>
    %c38_i32 = arith.constant 38 : i32
    %11 = vector.broadcast %c38_i32 : i32 to vector<20x256xi32>
    %12 = arith.cmpi slt, %3, %11 : vector<20x256xi32>
    %13 = arith.andi %10, %12 : vector<20x256xi1>
    %14 = arith.ori %8, %13 : vector<20x256xi1>
    %c42_i32 = arith.constant 42 : i32
    %15 = vector.broadcast %c42_i32 : i32 to vector<20x256xi32>
    %16 = arith.cmpi sge, %3, %15 : vector<20x256xi32>
    %c58_i32 = arith.constant 58 : i32
    %17 = vector.broadcast %c58_i32 : i32 to vector<20x256xi32>
    %18 = arith.cmpi slt, %3, %17 : vector<20x256xi32>
    %19 = arith.andi %16, %18 : vector<20x256xi1>
    %20 = arith.ori %14, %19 : vector<20x256xi1>
    %c62_i32 = arith.constant 62 : i32
    %21 = vector.broadcast %c62_i32 : i32 to vector<20x256xi32>
    %22 = arith.cmpi sge, %3, %21 : vector<20x256xi32>
    %c78_i32 = arith.constant 78 : i32
    %23 = vector.broadcast %c78_i32 : i32 to vector<20x256xi32>
    %24 = arith.cmpi slt, %3, %23 : vector<20x256xi32>
    %25 = arith.andi %22, %24 : vector<20x256xi1>
    %26 = arith.ori %20, %25 : vector<20x256xi1>
    %c82_i32 = arith.constant 82 : i32
    %27 = vector.broadcast %c82_i32 : i32 to vector<20x256xi32>
    %28 = arith.cmpi sge, %3, %27 : vector<20x256xi32>
    %c98_i32 = arith.constant 98 : i32
    %29 = vector.broadcast %c98_i32 : i32 to vector<20x256xi32>
    %30 = arith.cmpi slt, %3, %29 : vector<20x256xi32>
    %31 = arith.andi %28, %30 : vector<20x256xi1>
    %32 = arith.ori %26, %31 : vector<20x256xi1>
    %c102_i32 = arith.constant 102 : i32
    %33 = vector.broadcast %c102_i32 : i32 to vector<20x256xi32>
    %34 = arith.cmpi sge, %3, %33 : vector<20x256xi32>
    %c118_i32 = arith.constant 118 : i32
    %35 = vector.broadcast %c118_i32 : i32 to vector<20x256xi32>
    %36 = arith.cmpi slt, %3, %35 : vector<20x256xi32>
    %37 = arith.andi %34, %36 : vector<20x256xi1>
    %38 = arith.ori %32, %37 : vector<20x256xi1>
    %c122_i32 = arith.constant 122 : i32
    %39 = vector.broadcast %c122_i32 : i32 to vector<20x256xi32>
    %40 = arith.cmpi sge, %3, %39 : vector<20x256xi32>
    %c138_i32 = arith.constant 138 : i32
    %41 = vector.broadcast %c138_i32 : i32 to vector<20x256xi32>
    %42 = arith.cmpi slt, %3, %41 : vector<20x256xi32>
    %43 = arith.andi %40, %42 : vector<20x256xi1>
    %44 = arith.ori %38, %43 : vector<20x256xi1>
    %c142_i32 = arith.constant 142 : i32
    %45 = vector.broadcast %c142_i32 : i32 to vector<20x256xi32>
    %46 = arith.cmpi sge, %3, %45 : vector<20x256xi32>
    %c158_i32 = arith.constant 158 : i32
    %47 = vector.broadcast %c158_i32 : i32 to vector<20x256xi32>
    %48 = arith.cmpi slt, %3, %47 : vector<20x256xi32>
    %49 = arith.andi %46, %48 : vector<20x256xi1>
    %50 = arith.ori %44, %49 : vector<20x256xi1>
    %c2_i32_2 = arith.constant 2 : i32
    %51 = vector.broadcast %c2_i32_2 : i32 to vector<20x256xi32>
    %52 = arith.cmpi sge, %2, %51 : vector<20x256xi32>
    %53 = arith.andi %50, %52 : vector<20x256xi1>
    %c18_i32_3 = arith.constant 18 : i32
    %54 = vector.broadcast %c18_i32_3 : i32 to vector<20x256xi32>
    %55 = arith.cmpi slt, %2, %54 : vector<20x256xi32>
    %56 = arith.andi %53, %55 : vector<20x256xi1>
    %cst = arith.constant 0.402619958 : f32
    %57 = vector.broadcast %cst : f32 to vector<20x256xf32>
    %58 = arith.mulf %57, %1 : vector<20x256xf32>
    %cst_4 = arith.constant 0.000000e+00 : f32
    %59 = vector.broadcast %cst_4 : f32 to vector<1x256xf32>
    %60 = vector.extract_strided_slice %1 {offsets = [0, 0], sizes = [19, 256], strides = [1, 1]} : vector<20x256xf32> to vector<19x256xf32>
    %61 = tpu.concatenate %59, %60 in 0 : vector<1x256xf32>, vector<19x256xf32> -> vector<20x256xf32>
    %cst_5 = arith.constant 0.000000e+00 : f32
    %62 = vector.broadcast %cst_5 : f32 to vector<1x256xf32>
    %63 = vector.extract_strided_slice %1 {offsets = [1, 0], sizes = [19, 256], strides = [1, 1]} : vector<20x256xf32> to vector<19x256xf32>
    %64 = tpu.concatenate %63, %62 in 0 : vector<19x256xf32>, vector<1x256xf32> -> vector<20x256xf32>
    %65 = arith.addf %61, %64 : vector<20x256xf32>
    %cst_6 = arith.constant 0.244201347 : f32
    %66 = vector.broadcast %cst_6 : f32 to vector<20x256xf32>
    %67 = arith.mulf %66, %65 : vector<20x256xf32>
    %68 = arith.addf %58, %67 : vector<20x256xf32>
    %cst_7 = arith.constant 0.000000e+00 : f32
    %69 = vector.broadcast %cst_7 : f32 to vector<2x256xf32>
    %70 = vector.extract_strided_slice %1 {offsets = [0, 0], sizes = [18, 256], strides = [1, 1]} : vector<20x256xf32> to vector<18x256xf32>
    %71 = tpu.concatenate %69, %70 in 0 : vector<2x256xf32>, vector<18x256xf32> -> vector<20x256xf32>
    %cst_8 = arith.constant 0.000000e+00 : f32
    %72 = vector.broadcast %cst_8 : f32 to vector<2x256xf32>
    %73 = vector.extract_strided_slice %1 {offsets = [2, 0], sizes = [18, 256], strides = [1, 1]} : vector<20x256xf32> to vector<18x256xf32>
    %74 = tpu.concatenate %73, %72 in 0 : vector<18x256xf32>, vector<2x256xf32> -> vector<20x256xf32>
    %75 = arith.addf %71, %74 : vector<20x256xf32>
    %cst_9 = arith.constant 0.054488685 : f32
    %76 = vector.broadcast %cst_9 : f32 to vector<20x256xf32>
    %77 = arith.mulf %76, %75 : vector<20x256xf32>
    %78 = arith.addf %68, %77 : vector<20x256xf32>
    %cst_10 = arith.constant 0.402619958 : f32
    %79 = vector.broadcast %cst_10 : f32 to vector<20x256xf32>
    %80 = arith.mulf %79, %78 : vector<20x256xf32>
    %c1_i32 = arith.constant 1 : i32
    %81 = tpu.dynamic_rotate %78 by %c1_i32 dim 1 : vector<20x256xf32>, i32 -> vector<20x256xf32>
    %c255_i32 = arith.constant 255 : i32
    %82 = tpu.dynamic_rotate %78 by %c255_i32 dim 1 : vector<20x256xf32>, i32 -> vector<20x256xf32>
    %83 = arith.addf %81, %82 : vector<20x256xf32>
    %cst_11 = arith.constant 0.244201347 : f32
    %84 = vector.broadcast %cst_11 : f32 to vector<20x256xf32>
    %85 = arith.mulf %84, %83 : vector<20x256xf32>
    %86 = arith.addf %80, %85 : vector<20x256xf32>
    %c2_i32_12 = arith.constant 2 : i32
    %87 = tpu.dynamic_rotate %78 by %c2_i32_12 dim 1 : vector<20x256xf32>, i32 -> vector<20x256xf32>
    %c254_i32 = arith.constant 254 : i32
    %88 = tpu.dynamic_rotate %78 by %c254_i32 dim 1 : vector<20x256xf32>, i32 -> vector<20x256xf32>
    %89 = arith.addf %87, %88 : vector<20x256xf32>
    %cst_13 = arith.constant 0.054488685 : f32
    %90 = vector.broadcast %cst_13 : f32 to vector<20x256xf32>
    %91 = arith.mulf %90, %89 : vector<20x256xf32>
    %92 = arith.addf %86, %91 : vector<20x256xf32>
    %cst_14 = arith.constant 0.000000e+00 : f32
    %93 = vector.broadcast %cst_14 : f32 to vector<20x256xf32>
    %94 = arith.select %56, %92, %93 : vector<20x256xi1>, vector<20x256xf32>
    %cst_15 = arith.constant 0.000000e+00 : f32
    %95 = vector.broadcast %cst_15 : f32 to vector<1x256xf32>
    %96 = vector.extract_strided_slice %94 {offsets = [0, 0], sizes = [19, 256], strides = [1, 1]} : vector<20x256xf32> to vector<19x256xf32>
    %97 = tpu.concatenate %95, %96 in 0 : vector<1x256xf32>, vector<19x256xf32> -> vector<20x256xf32>
    %cst_16 = arith.constant 0.000000e+00 : f32
    %98 = vector.broadcast %cst_16 : f32 to vector<1x256xf32>
    %99 = vector.extract_strided_slice %94 {offsets = [1, 0], sizes = [19, 256], strides = [1, 1]} : vector<20x256xf32> to vector<19x256xf32>
    %100 = tpu.concatenate %99, %98 in 0 : vector<19x256xf32>, vector<1x256xf32> -> vector<20x256xf32>
    %cst_17 = arith.constant 2.000000e+00 : f32
    %101 = vector.broadcast %cst_17 : f32 to vector<20x256xf32>
    %102 = arith.mulf %101, %94 : vector<20x256xf32>
    %103 = arith.addf %97, %102 : vector<20x256xf32>
    %104 = arith.addf %103, %100 : vector<20x256xf32>
    %105 = arith.subf %100, %97 : vector<20x256xf32>
    %c255_i32_18 = arith.constant 255 : i32
    %106 = tpu.dynamic_rotate %104 by %c255_i32_18 dim 1 : vector<20x256xf32>, i32 -> vector<20x256xf32>
    %c1_i32_19 = arith.constant 1 : i32
    %107 = tpu.dynamic_rotate %104 by %c1_i32_19 dim 1 : vector<20x256xf32>, i32 -> vector<20x256xf32>
    %108 = arith.subf %106, %107 : vector<20x256xf32>
    %c1_i32_20 = arith.constant 1 : i32
    %109 = tpu.dynamic_rotate %105 by %c1_i32_20 dim 1 : vector<20x256xf32>, i32 -> vector<20x256xf32>
    %cst_21 = arith.constant 2.000000e+00 : f32
    %110 = vector.broadcast %cst_21 : f32 to vector<20x256xf32>
    %111 = arith.mulf %110, %105 : vector<20x256xf32>
    %112 = arith.addf %109, %111 : vector<20x256xf32>
    %c255_i32_22 = arith.constant 255 : i32
    %113 = tpu.dynamic_rotate %105 by %c255_i32_22 dim 1 : vector<20x256xf32>, i32 -> vector<20x256xf32>
    %114 = arith.addf %112, %113 : vector<20x256xf32>
    %115 = arith.mulf %108, %108 : vector<20x256xf32>
    %116 = arith.mulf %114, %114 : vector<20x256xf32>
    %117 = arith.addf %115, %116 : vector<20x256xf32>
    %cst_23 = arith.constant 0.000000e+00 : f32
    %118 = vector.broadcast %cst_23 : f32 to vector<20x256xf32>
    %119 = arith.select %56, %117, %118 : vector<20x256xi1>, vector<20x256xf32>
    %120 = math.absf %108 : vector<20x256xf32>
    %121 = math.absf %114 : vector<20x256xf32>
    %cst_24 = arith.constant 0.414213568 : f32
    %122 = vector.broadcast %cst_24 : f32 to vector<20x256xf32>
    %123 = arith.mulf %122, %120 : vector<20x256xf32>
    %124 = arith.cmpf ole, %121, %123 : vector<20x256xf32>
    %cst_25 = arith.constant 2.41421366 : f32
    %125 = vector.broadcast %cst_25 : f32 to vector<20x256xf32>
    %126 = arith.mulf %125, %120 : vector<20x256xf32>
    %127 = arith.cmpf ogt, %121, %126 : vector<20x256xf32>
    %cst_26 = arith.constant dense<true> : vector<20x256xi1>
    %128 = arith.xori %124, %cst_26 : vector<20x256xi1>
    %cst_27 = arith.constant dense<true> : vector<20x256xi1>
    %129 = arith.xori %127, %cst_27 : vector<20x256xi1>
    %130 = arith.andi %128, %129 : vector<20x256xi1>
    %131 = arith.mulf %108, %114 : vector<20x256xf32>
    %cst_28 = arith.constant 0.000000e+00 : f32
    %132 = vector.broadcast %cst_28 : f32 to vector<20x256xf32>
    %133 = arith.cmpf ogt, %131, %132 : vector<20x256xf32>
    %134 = arith.andi %130, %133 : vector<20x256xi1>
    %cst_29 = arith.constant 0.000000e+00 : f32
    %135 = vector.broadcast %cst_29 : f32 to vector<1x256xf32>
    %136 = vector.extract_strided_slice %119 {offsets = [0, 0], sizes = [19, 256], strides = [1, 1]} : vector<20x256xf32> to vector<19x256xf32>
    %137 = tpu.concatenate %135, %136 in 0 : vector<1x256xf32>, vector<19x256xf32> -> vector<20x256xf32>
    %cst_30 = arith.constant 0.000000e+00 : f32
    %138 = vector.broadcast %cst_30 : f32 to vector<1x256xf32>
    %139 = vector.extract_strided_slice %119 {offsets = [1, 0], sizes = [19, 256], strides = [1, 1]} : vector<20x256xf32> to vector<19x256xf32>
    %140 = tpu.concatenate %139, %138 in 0 : vector<19x256xf32>, vector<1x256xf32> -> vector<20x256xf32>
    %c1_i32_31 = arith.constant 1 : i32
    %141 = tpu.dynamic_rotate %119 by %c1_i32_31 dim 1 : vector<20x256xf32>, i32 -> vector<20x256xf32>
    %c1_i32_32 = arith.constant 1 : i32
    %142 = tpu.dynamic_rotate %140 by %c1_i32_32 dim 1 : vector<20x256xf32>, i32 -> vector<20x256xf32>
    %c1_i32_33 = arith.constant 1 : i32
    %143 = tpu.dynamic_rotate %137 by %c1_i32_33 dim 1 : vector<20x256xf32>, i32 -> vector<20x256xf32>
    %144 = arith.select %134, %142, %143 : vector<20x256xi1>, vector<20x256xf32>
    %145 = arith.select %127, %137, %144 : vector<20x256xi1>, vector<20x256xf32>
    %146 = arith.select %124, %141, %145 : vector<20x256xi1>, vector<20x256xf32>
    %c255_i32_34 = arith.constant 255 : i32
    %147 = tpu.dynamic_rotate %119 by %c255_i32_34 dim 1 : vector<20x256xf32>, i32 -> vector<20x256xf32>
    %c255_i32_35 = arith.constant 255 : i32
    %148 = tpu.dynamic_rotate %137 by %c255_i32_35 dim 1 : vector<20x256xf32>, i32 -> vector<20x256xf32>
    %c255_i32_36 = arith.constant 255 : i32
    %149 = tpu.dynamic_rotate %140 by %c255_i32_36 dim 1 : vector<20x256xf32>, i32 -> vector<20x256xf32>
    %150 = arith.select %134, %148, %149 : vector<20x256xi1>, vector<20x256xf32>
    %151 = arith.select %127, %140, %150 : vector<20x256xi1>, vector<20x256xf32>
    %152 = arith.select %124, %147, %151 : vector<20x256xi1>, vector<20x256xf32>
    %153 = arith.cmpf oge, %119, %146 : vector<20x256xf32>
    %154 = arith.cmpf oge, %119, %152 : vector<20x256xf32>
    %155 = arith.andi %153, %154 : vector<20x256xi1>
    %cst_37 = arith.constant 0.000000e+00 : f32
    %156 = vector.broadcast %cst_37 : f32 to vector<20x256xf32>
    %157 = arith.select %155, %119, %156 : vector<20x256xi1>, vector<20x256xf32>
    %cst_38 = arith.constant 4.000000e-02 : f32
    %158 = vector.broadcast %cst_38 : f32 to vector<20x256xf32>
    %159 = arith.cmpf oge, %157, %158 : vector<20x256xf32>
    %160 = arith.andi %56, %159 : vector<20x256xi1>
    %cst_39 = arith.constant 1.000000e+00 : f32
    %cst_40 = arith.constant 0.000000e+00 : f32
    %161 = vector.broadcast %cst_39 : f32 to vector<20x256xf32>
    %162 = vector.broadcast %cst_40 : f32 to vector<20x256xf32>
    %163 = arith.select %160, %161, %162 : vector<20x256xi1>, vector<20x256xf32>
    %cst_41 = arith.constant 0.000000e+00 : f32
    %164 = vector.broadcast %cst_41 : f32 to vector<1x256xf32>
    %165 = vector.extract_strided_slice %163 {offsets = [0, 0], sizes = [19, 256], strides = [1, 1]} : vector<20x256xf32> to vector<19x256xf32>
    %166 = tpu.concatenate %164, %165 in 0 : vector<1x256xf32>, vector<19x256xf32> -> vector<20x256xf32>
    %cst_42 = arith.constant 0.000000e+00 : f32
    %167 = vector.broadcast %cst_42 : f32 to vector<1x256xf32>
    %168 = vector.extract_strided_slice %163 {offsets = [1, 0], sizes = [19, 256], strides = [1, 1]} : vector<20x256xf32> to vector<19x256xf32>
    %169 = tpu.concatenate %168, %167 in 0 : vector<19x256xf32>, vector<1x256xf32> -> vector<20x256xf32>
    %170 = arith.maximumf %166, %169 : vector<20x256xf32>
    %c1_i32_43 = arith.constant 1 : i32
    %171 = tpu.dynamic_rotate %163 by %c1_i32_43 dim 1 : vector<20x256xf32>, i32 -> vector<20x256xf32>
    %172 = arith.maximumf %170, %171 : vector<20x256xf32>
    %c255_i32_44 = arith.constant 255 : i32
    %173 = tpu.dynamic_rotate %163 by %c255_i32_44 dim 1 : vector<20x256xf32>, i32 -> vector<20x256xf32>
    %174 = arith.maximumf %172, %173 : vector<20x256xf32>
    %c1_i32_45 = arith.constant 1 : i32
    %175 = tpu.dynamic_rotate %166 by %c1_i32_45 dim 1 : vector<20x256xf32>, i32 -> vector<20x256xf32>
    %176 = arith.maximumf %174, %175 : vector<20x256xf32>
    %c255_i32_46 = arith.constant 255 : i32
    %177 = tpu.dynamic_rotate %166 by %c255_i32_46 dim 1 : vector<20x256xf32>, i32 -> vector<20x256xf32>
    %178 = arith.maximumf %176, %177 : vector<20x256xf32>
    %c1_i32_47 = arith.constant 1 : i32
    %179 = tpu.dynamic_rotate %169 by %c1_i32_47 dim 1 : vector<20x256xf32>, i32 -> vector<20x256xf32>
    %180 = arith.maximumf %178, %179 : vector<20x256xf32>
    %c255_i32_48 = arith.constant 255 : i32
    %181 = tpu.dynamic_rotate %169 by %c255_i32_48 dim 1 : vector<20x256xf32>, i32 -> vector<20x256xf32>
    %182 = arith.maximumf %180, %181 : vector<20x256xf32>
    %cst_49 = arith.constant 0.00999999977 : f32
    %183 = vector.broadcast %cst_49 : f32 to vector<20x256xf32>
    %184 = arith.cmpf oge, %157, %183 : vector<20x256xf32>
    %cst_50 = arith.constant dense<true> : vector<20x256xi1>
    %185 = arith.xori %159, %cst_50 : vector<20x256xi1>
    %186 = arith.andi %184, %185 : vector<20x256xi1>
    %cst_51 = arith.constant 0.000000e+00 : f32
    %187 = vector.broadcast %cst_51 : f32 to vector<20x256xf32>
    %188 = arith.cmpf ogt, %182, %187 : vector<20x256xf32>
    %189 = arith.andi %186, %188 : vector<20x256xi1>
    %190 = arith.ori %159, %189 : vector<20x256xi1>
    %cst_52 = arith.constant 1.000000e+00 : f32
    %cst_53 = arith.constant 0.000000e+00 : f32
    %191 = vector.broadcast %cst_52 : f32 to vector<20x256xf32>
    %192 = vector.broadcast %cst_53 : f32 to vector<20x256xf32>
    %193 = arith.select %190, %191, %192 : vector<20x256xi1>, vector<20x256xf32>
    %194 = vector.extract_strided_slice %193 {offsets = [2, 0], sizes = [16, 256], strides = [1, 1]} : vector<20x256xf32> to vector<16x256xf32>
    %c0_54 = arith.constant 0 : index
    %c0_55 = arith.constant 0 : index
    %c0_56 = arith.constant 0 : index
    %195 = vector.load %arg2[%c0_54, %c0_55, %c0_56] : memref<1x16x256xf32, #tpu.memory_space<vmem>>, vector<1x16x256xf32>
    %196 = vector.shape_cast %195 : vector<1x16x256xf32> to vector<16x256xf32>
    %197 = vector.shape_cast %194 : vector<16x256xf32> to vector<1x16x256xf32>
    tpu.vector_store %arg2[%c0_54, %c0_55, %c0_56], %197 {strides = array<i32>} : memref<1x16x256xf32, #tpu.memory_space<vmem>>, vector<1x16x256xf32>,
    return
  }
  func.func @transform_0(%arg0: i32) -> (i32, i32, i32) {
    %c0_i32 = arith.constant 0 : i32
    %c0_i32_0 = arith.constant 0 : i32
    %c0_i32_1 = arith.constant 0 : i32
    return %arg0, %c0_i32, %c0_i32_0 : i32, i32, i32
  }
  func.func @transform_1(%arg0: i32) -> (i32, i32, i32) {
    %c0_i32 = arith.constant 0 : i32
    %c0_i32_0 = arith.constant 0 : i32
    %c0_i32_1 = arith.constant 0 : i32
    return %arg0, %c0_i32, %c0_i32_0 : i32, i32, i32
  }
}

</mosaic_0001>

<llo_original>
// kernel: canny_edge_detector.1
$region0: #{canny_edge_detector.1}
  #allocation0 [shape = 'u32[]', space=smem, size = 0x4, offset = 0x4, fixed_abs, tag = 'smem constant byte address 0x4 - core index']
  #allocation1 [shape = 'u32[144,128]{1,0:T(1,128)}', space=vmem, size = 0x12000, scoped, tag = 'internal scratch']
  %s0 = inlined_call_operand.vmem [shape: f32[1,20,256], index: 0, kind: input, shape index: {}]
  %s1 = inlined_call_operand.vmem [shape: f32[1,16,256], index: 1, kind: output, shape index: {}]
  %s2 = sld [smem:[#allocation0]]
  $region14: #{canny_edge_detector.1} parent=0
    _
  %s4 = ssub.s32 1, %s2
  %s5 = scalar_select 0, %s4, %s2
  // Predicated region
  $region2: #{canny_edge_detector.1} parent=0 // pred_check
    _
  $region3: #{canny_edge_detector.1} parent=0 // pred_check_branch
    %7 = sbr.rel (0) target = $region5
  $region4: #{canny_edge_detector.1} parent=0 // pred_region
    _
  $region5: #{canny_edge_detector.1} parent=0 // pred_fallthru
    _
  %v8 = vld [vmem:[%s0] sm:$0xff]
  %v9 = vld [vmem:[%s0 + $0x8] sm:$0xff]
  %v10 = vld [vmem:[%s0 + $0x10] sm:$0xff]
  %v11 = vld [vmem:[%s0 + $0x18] sm:$0xff]
  %v12 = vld [vmem:[%s0 + $0x20] sm:$0xf]
  %v13 = vld [vmem:[%s0 + $0x28] sm:$0xf]
  %v14 = vlaneseq
  %v15 = vshrl.u32 %v14, 7
  %v16 = vadd.s32 %v15, 8
  %v17 = vadd.s32 %v15, 16
  %v18 = vlaneseq
  %v19 = vand.u32 %v18, 127
  %v20 = vadd.s32 %v19, 128
  %vm21 = vcmp.ge.s32.totalorder %v19, 2
  %vm22 = vcmp.ge.s32.totalorder %v20, 2
  %vm23 = vcmp.lt.s32.totalorder %v19, 18
  %vm24 = vcmp.lt.s32.totalorder %v20, 18
  %vm25 = vmand %vm21, %vm23
  %vm26 = vmand %vm22, %vm24
  %vm27 = vcmp.ge.s32.totalorder %v19, 22
  %vm28 = vcmp.ge.s32.totalorder %v20, 22
  %vm29 = vcmp.lt.s32.totalorder %v19, 38
  %vm30 = vcmp.lt.s32.totalorder %v20, 38
  %vm31 = vmand %vm27, %vm29
  %vm32 = vmand %vm28, %vm30
  %vm33 = vmor %vm25, %vm31
  %vm34 = vmor %vm26, %vm32
  %vm35 = vcmp.ge.s32.totalorder %v19, 42
  %vm36 = vcmp.ge.s32.totalorder %v20, 42
  %vm37 = vcmp.lt.s32.totalorder %v19, 58
  %vm38 = vcmp.lt.s32.totalorder %v20, 58
  %vm39 = vmand %vm35, %vm37
  %vm40 = vmand %vm36, %vm38
  %vm41 = vmor %vm33, %vm39
  %vm42 = vmor %vm34, %vm40
  %vm43 = vcmp.ge.s32.totalorder %v19, 62
  %vm44 = vcmp.ge.s32.totalorder %v20, 62
  %vm45 = vcmp.lt.s32.totalorder %v19, 78
  %vm46 = vcmp.lt.s32.totalorder %v20, 78
  %vm47 = vmand %vm43, %vm45
  %vm48 = vmand %vm44, %vm46
  %vm49 = vmor %vm41, %vm47
  %vm50 = vmor %vm42, %vm48
  %vm51 = vcmp.ge.s32.totalorder %v19, 82
  %vm52 = vcmp.ge.s32.totalorder %v20, 82
  %vm53 = vcmp.lt.s32.totalorder %v19, 98
  %vm54 = vcmp.lt.s32.totalorder %v20, 98
  %vm55 = vmand %vm51, %vm53
  %vm56 = vmand %vm52, %vm54
  %vm57 = vmor %vm49, %vm55
  %vm58 = vmor %vm50, %vm56
  %vm59 = vcmp.ge.s32.totalorder %v19, 102
  %vm60 = vcmp.ge.s32.totalorder %v20, 102
  %vm61 = vcmp.lt.s32.totalorder %v19, 118
  %vm62 = vcmp.lt.s32.totalorder %v20, 118
  %vm63 = vmand %vm59, %vm61
  %vm64 = vmand %vm60, %vm62
  %vm65 = vmor %vm57, %vm63
  %vm66 = vmor %vm58, %vm64
  %vm67 = vcmp.ge.s32.totalorder %v19, 122
  %vm68 = vcmp.ge.s32.totalorder %v20, 122
  %vm69 = vcmp.lt.s32.totalorder %v19, 138
  %vm70 = vcmp.lt.s32.totalorder %v20, 138
  %vm71 = vmand %vm67, %vm69
  %vm72 = vmand %vm68, %vm70
  %vm73 = vmor %vm65, %vm71
  %vm74 = vmor %vm66, %vm72
  %vm75 = vcmp.ge.s32.totalorder %v19, 142
  %vm76 = vcmp.ge.s32.totalorder %v20, 142
  %vm77 = vcmp.lt.s32.totalorder %v19, 158
  %vm78 = vcmp.lt.s32.totalorder %v20, 158
  %vm79 = vmand %vm75, %vm77
  %vm80 = vmand %vm76, %vm78
  %vm81 = vmor %vm73, %vm79
  %vm82 = vmor %vm74, %vm80
  %vm83 = vcmp.ge.s32.totalorder %v15, 2
  %vm84 = vcmp.ge.s32.totalorder %v16, 2
  %vm85 = vcmp.ge.s32.totalorder %v17, 2
  %vm86 = vmand %vm81, %vm83
  %vm87 = vmand %vm82, %vm83
  %vm88 = vmand %vm81, %vm84
  %vm89 = vmand %vm82, %vm84
  %vm90 = vmand %vm81, %vm85
  %vm91 = vmand %vm82, %vm85
  %vm92 = vcmp.lt.s32.totalorder %v15, 18
  %vm93 = vcmp.lt.s32.totalorder %v16, 18
  %vm94 = vcmp.lt.s32.totalorder %v17, 18
  %vm95 = vmand %vm86, %vm92
  %vm96 = vmand %vm87, %vm92
  %vm97 = vmand %vm88, %vm93
  %vm98 = vmand %vm89, %vm93
  %vm99 = vmand %vm90, %vm94
  %vm100 = vmand %vm91, %vm94
  %v101 = vmul.f32 %v8, 0.40261996
  %v102 = vmul.f32 %v9, 0.40261996
  %v103 = vmul.f32 %v10, 0.40261996
  %v104 = vmul.f32 %v11, 0.40261996
  %v105 = vmul.f32 %v12, 0.40261996
  %v106 = vmul.f32 %v13, 0.40261996
  %vm113 = vcmask 1040384
  %v114 = vrot.slane %v8, 7
  %v115 = vrot.slane %v9, 7
  %v116 = vrot.slane %v10, 7
  %v117 = vsel %vm113, %v114, %v116
  %v118 = vrot.slane %v11, 7
  %v119 = vsel %vm113, %v115, %v118
  %v120 = vrot.slane %v12, 7
  %v121 = vsel %vm113, %v116, %v120
  %v122 = vrot.slane %v13, 7
  %v123 = vsel %vm113, %v118, %v122
  %v130 = vsel %vm113, 0.0, %v114
  %v131 = vsel %vm113, 0.0, %v115
  %vm132 = vcmask 1046528
  %v133 = vrot.slane %v8, 1
  %v134 = vrot.slane %v10, 1
  %v135 = vsel %vm132, %v133, %v134
  %v136 = vrot.slane %v9, 1
  %v137 = vrot.slane %v11, 1
  %v138 = vsel %vm132, %v136, %v137
  %v139 = vrot.slane %v12, 1
  %v140 = vsel %vm132, %v134, %v139
  %v141 = vrot.slane %v13, 1
  %v142 = vsel %vm132, %v137, %v141
  %vm149 = vcmask 1042432
  %v150 = vsel %vm149, %v139, 0.0
  %v151 = vsel %vm149, %v141, 0.0
  %v152 = vadd.f32 %v130, %v135
  %v153 = vadd.f32 %v131, %v138
  %v154 = vadd.f32 %v117, %v140
  %v155 = vadd.f32 %v119, %v142
  %v156 = vadd.f32 %v121, %v150
  %v157 = vadd.f32 %v123, %v151
  %v158 = vmul.f32 %v152, 0.24420135
  %v159 = vmul.f32 %v153, 0.24420135
  %v160 = vmul.f32 %v154, 0.24420135
  %v161 = vmul.f32 %v155, 0.24420135
  %v162 = vmul.f32 %v156, 0.24420135
  %v163 = vmul.f32 %v157, 0.24420135
  %v164 = vadd.f32 %v101, %v158
  %v165 = vadd.f32 %v102, %v159
  %v166 = vadd.f32 %v103, %v160
  %v167 = vadd.f32 %v104, %v161
  %v168 = vadd.f32 %v105, %v162
  %v169 = vadd.f32 %v106, %v163
  %vm170 = vcmask 1041408
  %v171 = vrot.slane %v8, 6
  %v172 = vrot.slane %v9, 6
  %v173 = vrot.slane %v10, 6
  %v174 = vsel %vm170, %v171, %v173
  %v175 = vrot.slane %v11, 6
  %v176 = vsel %vm170, %v172, %v175
  %v177 = vrot.slane %v12, 6
  %v178 = vsel %vm170, %v173, %v177
  %v179 = vrot.slane %v13, 6
  %v180 = vsel %vm170, %v175, %v179
  %v187 = vsel %vm170, 0.0, %v171
  %v188 = vsel %vm170, 0.0, %v172
  %vm189 = vcmask 1045504
  %v190 = vrot.slane %v8, 2
  %v191 = vrot.slane %v10, 2
  %v192 = vsel %vm189, %v190, %v191
  %v193 = vrot.slane %v9, 2
  %v194 = vrot.slane %v11, 2
  %v195 = vsel %vm189, %v193, %v194
  %v196 = vrot.slane %v12, 2
  %v197 = vsel %vm189, %v191, %v196
  %v198 = vrot.slane %v13, 2
  %v199 = vsel %vm189, %v194, %v198
  %v206 = vsel %vm170, %v196, 0.0
  %v207 = vsel %vm170, %v198, 0.0
  %v208 = vadd.f32 %v187, %v192
  %v209 = vadd.f32 %v188, %v195
  %v210 = vadd.f32 %v174, %v197
  %v211 = vadd.f32 %v176, %v199
  %v212 = vadd.f32 %v178, %v206
  %v213 = vadd.f32 %v180, %v207
  %v214 = vmul.f32 %v208, 0.054488685
  %v215 = vmul.f32 %v209, 0.054488685
  %v216 = vmul.f32 %v210, 0.054488685
  %v217 = vmul.f32 %v211, 0.054488685
  %v218 = vmul.f32 %v212, 0.054488685
  %v219 = vmul.f32 %v213, 0.054488685
  %v220 = vadd.f32 %v164, %v214
  %v221 = vadd.f32 %v165, %v215
  %v222 = vadd.f32 %v166, %v216
  %v223 = vadd.f32 %v167, %v217
  %v224 = vadd.f32 %v168, %v218
  %v225 = vadd.f32 %v169, %v219
  %v226 = vmul.f32 %v220, 0.40261996
  %v227 = vmul.f32 %v221, 0.40261996
  %v228 = vmul.f32 %v222, 0.40261996
  %v229 = vmul.f32 %v223, 0.40261996
  %v230 = vmul.f32 %v224, 0.40261996
  %v231 = vmul.f32 %v225, 0.40261996
  %232 = vrot.lane.b32.xlu0 %v220, 1
  %v233 = vpop.permute.xlu0 %232
  %234 = vrot.lane.b32.xlu0 %v222, 1
  %v235 = vpop.permute.xlu0 %234
  %236 = vrot.lane.b32.xlu0 %v224, 1
  %v237 = vpop.permute.xlu0 %236
  %238 = vrot.lane.b32.xlu0 %v221, 1
  %v239 = vpop.permute.xlu0 %238
  %240 = vrot.lane.b32.xlu0 %v223, 1
  %v241 = vpop.permute.xlu0 %240
  %242 = vrot.lane.b32.xlu0 %v225, 1
  %v243 = vpop.permute.xlu0 %242
  %vm244 = vcmp.lt.s32.totalorder %v19, 1
  %v245 = vsel %vm244, %v233, %v239
  %v246 = vsel %vm244, %v235, %v241
  %v247 = vsel %vm244, %v237, %v243
  %v248 = vsel %vm244, %v239, %v233
  %v249 = vsel %vm244, %v241, %v235
  %v250 = vsel %vm244, %v243, %v237
  %251 = vrot.lane.b32.xlu0 %v220, 127
  %v252 = vpop.permute.xlu0 %251
  %253 = vrot.lane.b32.xlu0 %v222, 127
  %v254 = vpop.permute.xlu0 %253
  %255 = vrot.lane.b32.xlu0 %v224, 127
  %v256 = vpop.permute.xlu0 %255
  %257 = vrot.lane.b32.xlu0 %v221, 127
  %v258 = vpop.permute.xlu0 %257
  %259 = vrot.lane.b32.xlu0 %v223, 127
  %v260 = vpop.permute.xlu0 %259
  %261 = vrot.lane.b32.xlu0 %v225, 127
  %v262 = vpop.permute.xlu0 %261
  %vm263 = vcmp.lt.s32.totalorder %v19, 127
  %v264 = vsel %vm263, %v252, %v258
  %v265 = vsel %vm263, %v254, %v260
  %v266 = vsel %vm263, %v256, %v262
  %v267 = vsel %vm263, %v258, %v252
  %v268 = vsel %vm263, %v260, %v254
  %v269 = vsel %vm263, %v262, %v256
  %v270 = vadd.f32 %v248, %v264
  %v271 = vadd.f32 %v245, %v267
  %v272 = vadd.f32 %v249, %v265
  %v273 = vadd.f32 %v246, %v268
  %v274 = vadd.f32 %v250, %v266
  %v275 = vadd.f32 %v247, %v269
  %v276 = vmul.f32 %v270, 0.24420135
  %v277 = vmul.f32 %v271, 0.24420135
  %v278 = vmul.f32 %v272, 0.24420135
  %v279 = vmul.f32 %v273, 0.24420135
  %v280 = vmul.f32 %v274, 0.24420135
  %v281 = vmul.f32 %v275, 0.24420135
  %v282 = vadd.f32 %v226, %v276
  %v283 = vadd.f32 %v227, %v277
  %v284 = vadd.f32 %v228, %v278
  %v285 = vadd.f32 %v229, %v279
  %v286 = vadd.f32 %v230, %v280
  %v287 = vadd.f32 %v231, %v281
  %288 = vrot.lane.b32.xlu0 %v220, 2
  %v289 = vpop.permute.xlu0 %288
  %290 = vrot.lane.b32.xlu0 %v222, 2
  %v291 = vpop.permute.xlu0 %290
  %292 = vrot.lane.b32.xlu0 %v224, 2
  %v293 = vpop.permute.xlu0 %292
  %294 = vrot.lane.b32.xlu0 %v221, 2
  %v295 = vpop.permute.xlu0 %294
  %296 = vrot.lane.b32.xlu0 %v223, 2
  %v297 = vpop.permute.xlu0 %296
  %298 = vrot.lane.b32.xlu0 %v225, 2
  %v299 = vpop.permute.xlu0 %298
  %vm300 = vcmp.lt.s32.totalorder %v19, 2
  %v301 = vsel %vm300, %v289, %v295
  %v302 = vsel %vm300, %v291, %v297
  %v303 = vsel %vm300, %v293, %v299
  %v304 = vsel %vm300, %v295, %v289
  %v305 = vsel %vm300, %v297, %v291
  %v306 = vsel %vm300, %v299, %v293
  %307 = vrot.lane.b32.xlu0 %v220, 126
  %v308 = vpop.permute.xlu0 %307
  %309 = vrot.lane.b32.xlu0 %v222, 126
  %v310 = vpop.permute.xlu0 %309
  %311 = vrot.lane.b32.xlu0 %v224, 126
  %v312 = vpop.permute.xlu0 %311
  %313 = vrot.lane.b32.xlu0 %v221, 126
  %v314 = vpop.permute.xlu0 %313
  %315 = vrot.lane.b32.xlu0 %v223, 126
  %v316 = vpop.permute.xlu0 %315
  %317 = vrot.lane.b32.xlu0 %v225, 126
  %v318 = vpop.permute.xlu0 %317
  %vm319 = vcmp.lt.s32.totalorder %v19, 126
  %v320 = vsel %vm319, %v308, %v314
  %v321 = vsel %vm319, %v310, %v316
  %v322 = vsel %vm319, %v312, %v318
  %v323 = vsel %vm319, %v314, %v308
  %v324 = vsel %vm319, %v316, %v310
  %v325 = vsel %vm319, %v318, %v312
  %v326 = vadd.f32 %v304, %v320
  %v327 = vadd.f32 %v301, %v323
  %v328 = vadd.f32 %v305, %v321
  %v329 = vadd.f32 %v302, %v324
  %v330 = vadd.f32 %v306, %v322
  %v331 = vadd.f32 %v303, %v325
  %v332 = vmul.f32 %v326, 0.054488685
  %v333 = vmul.f32 %v327, 0.054488685
  %v334 = vmul.f32 %v328, 0.054488685
  %v335 = vmul.f32 %v329, 0.054488685
  %v336 = vmul.f32 %v330, 0.054488685
  %v337 = vmul.f32 %v331, 0.054488685
  %v338 = vadd.f32 %v282, %v332
  %v339 = vadd.f32 %v283, %v333
  %v340 = vadd.f32 %v284, %v334
  %v341 = vadd.f32 %v285, %v335
  %v342 = vadd.f32 %v286, %v336
  %v343 = vadd.f32 %v287, %v337
  %v344 = vsel %vm95, %v338, 0.0
  %v345 = vsel %vm96, %v339, 0.0
  %v346 = vsel %vm97, %v340, 0.0
  %v347 = vsel %vm98, %v341, 0.0
  %v348 = vsel %vm99, %v342, 0.0
  %v349 = vsel %vm100, %v343, 0.0
  %v356 = vrot.slane %v344, 7
  %v357 = vrot.slane %v345, 7
  %v358 = vrot.slane %v346, 7
  %v359 = vsel %vm113, %v356, %v358
  %v360 = vrot.slane %v347, 7
  %v361 = vsel %vm113, %v357, %v360
  %v362 = vrot.slane %v348, 7
  %v363 = vsel %vm113, %v358, %v362
  %v364 = vrot.slane %v349, 7
  %v365 = vsel %vm113, %v360, %v364
  %v372 = vsel %vm113, 0.0, %v356
  %v373 = vsel %vm113, 0.0, %v357
  %v374 = vrot.slane %v344, 1
  %v375 = vrot.slane %v346, 1
  %v376 = vsel %vm132, %v374, %v375
  %v377 = vrot.slane %v345, 1
  %v378 = vrot.slane %v347, 1
  %v379 = vsel %vm132, %v377, %v378
  %v380 = vrot.slane %v348, 1
  %v381 = vsel %vm132, %v375, %v380
  %v382 = vrot.slane %v349, 1
  %v383 = vsel %vm132, %v378, %v382
  %v390 = vsel %vm149, %v380, 0.0
  %v391 = vsel %vm149, %v382, 0.0
  %v392 = vmul.f32 %v344, 2.0
  %v393 = vmul.f32 %v345, 2.0
  %v394 = vmul.f32 %v346, 2.0
  %v395 = vmul.f32 %v347, 2.0
  %v396 = vmul.f32 %v348, 2.0
  %v397 = vmul.f32 %v349, 2.0
  %v398 = vadd.f32 %v372, %v392
  %v399 = vadd.f32 %v373, %v393
  %v400 = vadd.f32 %v359, %v394
  %v401 = vadd.f32 %v361, %v395
  %v402 = vadd.f32 %v363, %v396
  %v403 = vadd.f32 %v365, %v397
  %v404 = vadd.f32 %v398, %v376
  %v405 = vadd.f32 %v399, %v379
  %v406 = vadd.f32 %v400, %v381
  %v407 = vadd.f32 %v401, %v383
  %v408 = vadd.f32 %v402, %v390
  %v409 = vadd.f32 %v403, %v391
  %v410 = vsub.f32 %v376, %v372
  %v411 = vsub.f32 %v379, %v373
  %v412 = vsub.f32 %v381, %v359
  %v413 = vsub.f32 %v383, %v361
  %v414 = vsub.f32 %v390, %v363
  %v415 = vsub.f32 %v391, %v365
  %416 = vrot.lane.b32.xlu0 %v404, 127
  %v417 = vpop.permute.xlu0 %416
  %418 = vrot.lane.b32.xlu0 %v406, 127
  %v419 = vpop.permute.xlu0 %418
  %420 = vrot.lane.b32.xlu0 %v408, 127
  %v421 = vpop.permute.xlu0 %420
  %422 = vrot.lane.b32.xlu0 %v405, 127
  %v423 = vpop.permute.xlu0 %422
  %424 = vrot.lane.b32.xlu0 %v407, 127
  %v425 = vpop.permute.xlu0 %424
  %426 = vrot.lane.b32.xlu0 %v409, 127
  %v427 = vpop.permute.xlu0 %426
  %v428 = vsel %vm263, %v417, %v423
  %v429 = vsel %vm263, %v419, %v425
  %v430 = vsel %vm263, %v421, %v427
  %v431 = vsel %vm263, %v423, %v417
  %v432 = vsel %vm263, %v425, %v419
  %v433 = vsel %vm263, %v427, %v421
  %434 = vrot.lane.b32.xlu0 %v404, 1
  %v435 = vpop.permute.xlu0 %434
  %436 = vrot.lane.b32.xlu0 %v406, 1
  %v437 = vpop.permute.xlu0 %436
  %438 = vrot.lane.b32.xlu0 %v408, 1
  %v439 = vpop.permute.xlu0 %438
  %440 = vrot.lane.b32.xlu0 %v405, 1
  %v441 = vpop.permute.xlu0 %440
  %442 = vrot.lane.b32.xlu0 %v407, 1
  %v443 = vpop.permute.xlu0 %442
  %444 = vrot.lane.b32.xlu0 %v409, 1
  %v445 = vpop.permute.xlu0 %444
  %v446 = vsel %vm244, %v435, %v441
  %v447 = vsel %vm244, %v437, %v443
  %v448 = vsel %vm244, %v439, %v445
  %v449 = vsel %vm244, %v441, %v435
  %v450 = vsel %vm244, %v443, %v437
  %v451 = vsel %vm244, %v445, %v439
  %v452 = vsub.f32 %v428, %v449
  %v453 = vsub.f32 %v431, %v446
  %v454 = vsub.f32 %v429, %v450
  %v455 = vsub.f32 %v432, %v447
  %v456 = vsub.f32 %v430, %v451
  %v457 = vsub.f32 %v433, %v448
  %458 = vrot.lane.b32.xlu0 %v410, 1
  %v459 = vpop.permute.xlu0 %458
  %460 = vrot.lane.b32.xlu0 %v412, 1
  %v461 = vpop.permute.xlu0 %460
  %462 = vrot.lane.b32.xlu0 %v414, 1
  %v463 = vpop.permute.xlu0 %462
  %464 = vrot.lane.b32.xlu0 %v411, 1
  %v465 = vpop.permute.xlu0 %464
  %466 = vrot.lane.b32.xlu0 %v413, 1
  %v467 = vpop.permute.xlu0 %466
  %468 = vrot.lane.b32.xlu0 %v415, 1
  %v469 = vpop.permute.xlu0 %468
  %v470 = vsel %vm244, %v459, %v465
  %v471 = vsel %vm244, %v461, %v467
  %v472 = vsel %vm244, %v463, %v469
  %v473 = vsel %vm244, %v465, %v459
  %v474 = vsel %vm244, %v467, %v461
  %v475 = vsel %vm244, %v469, %v463
  %v476 = vmul.f32 %v410, 2.0
  %v477 = vmul.f32 %v411, 2.0
  %v478 = vmul.f32 %v412, 2.0
  %v479 = vmul.f32 %v413, 2.0
  %v480 = vmul.f32 %v414, 2.0
  %v481 = vmul.f32 %v415, 2.0
  %v482 = vadd.f32 %v473, %v476
  %v483 = vadd.f32 %v470, %v477
  %v484 = vadd.f32 %v474, %v478
  %v485 = vadd.f32 %v471, %v479
  %v486 = vadd.f32 %v475, %v480
  %v487 = vadd.f32 %v472, %v481
  %488 = vrot.lane.b32.xlu0 %v410, 127
  %v489 = vpop.permute.xlu0 %488
  %490 = vrot.lane.b32.xlu0 %v412, 127
  %v491 = vpop.permute.xlu0 %490
  %492 = vrot.lane.b32.xlu0 %v414, 127
  %v493 = vpop.permute.xlu0 %492
  %494 = vrot.lane.b32.xlu0 %v411, 127
  %v495 = vpop.permute.xlu0 %494
  %496 = vrot.lane.b32.xlu0 %v413, 127
  %v497 = vpop.permute.xlu0 %496
  %498 = vrot.lane.b32.xlu0 %v415, 127
  %v499 = vpop.permute.xlu0 %498
  %v500 = vsel %vm263, %v489, %v495
  %v501 = vsel %vm263, %v491, %v497
  %v502 = vsel %vm263, %v493, %v499
  %v503 = vsel %vm263, %v495, %v489
  %v504 = vsel %vm263, %v497, %v491
  %v505 = vsel %vm263, %v499, %v493
  %v506 = vadd.f32 %v482, %v500
  %v507 = vadd.f32 %v483, %v503
  %v508 = vadd.f32 %v484, %v501
  %v509 = vadd.f32 %v485, %v504
  %v510 = vadd.f32 %v486, %v502
  %v511 = vadd.f32 %v487, %v505
  %v512 = vmul.f32 %v452, %v452
  %v513 = vmul.f32 %v453, %v453
  %v514 = vmul.f32 %v454, %v454
  %v515 = vmul.f32 %v455, %v455
  %v516 = vmul.f32 %v456, %v456
  %v517 = vmul.f32 %v457, %v457
  %v518 = vmul.f32 %v506, %v506
  %v519 = vmul.f32 %v507, %v507
  %v520 = vmul.f32 %v508, %v508
  %v521 = vmul.f32 %v509, %v509
  %v522 = vmul.f32 %v510, %v510
  %v523 = vmul.f32 %v511, %v511
  %v524 = vadd.f32 %v512, %v518
  %v525 = vadd.f32 %v513, %v519
  %v526 = vadd.f32 %v514, %v520
  %v527 = vadd.f32 %v515, %v521
  %v528 = vadd.f32 %v516, %v522
  %v529 = vadd.f32 %v517, %v523
  %v530 = vsel %vm95, %v524, 0.0
  %v531 = vsel %vm96, %v525, 0.0
  %v532 = vsel %vm97, %v526, 0.0
  %v533 = vsel %vm98, %v527, 0.0
  %v534 = vsel %vm99, %v528, 0.0
  %v535 = vsel %vm100, %v529, 0.0
  %v536 = vand.u32 2147483647, %v452
  %v537 = vand.u32 2147483647, %v453
  %v538 = vand.u32 2147483647, %v454
  %v539 = vand.u32 2147483647, %v455
  %v540 = vand.u32 2147483647, %v456
  %v541 = vand.u32 2147483647, %v457
  %v542 = vand.u32 2147483647, %v506
  %v543 = vand.u32 2147483647, %v507
  %v544 = vand.u32 2147483647, %v508
  %v545 = vand.u32 2147483647, %v509
  %v546 = vand.u32 2147483647, %v510
  %v547 = vand.u32 2147483647, %v511
  %v548 = vmul.f32 %v536, 0.41421357
  %v549 = vmul.f32 %v537, 0.41421357
  %v550 = vmul.f32 %v538, 0.41421357
  %v551 = vmul.f32 %v539, 0.41421357
  %v552 = vmul.f32 %v540, 0.41421357
  %v553 = vmul.f32 %v541, 0.41421357
  %vm554 = vcmp.le.f32.partialorder %v542, %v548
  %vm555 = vcmp.le.f32.partialorder %v543, %v549
  %vm556 = vcmp.le.f32.partialorder %v544, %v550
  %vm557 = vcmp.le.f32.partialorder %v545, %v551
  %vm558 = vcmp.le.f32.partialorder %v546, %v552
  %vm559 = vcmp.le.f32.partialorder %v547, %v553
  %v560 = vmul.f32 %v536, 2.4142137
  %v561 = vmul.f32 %v537, 2.4142137
  %v562 = vmul.f32 %v538, 2.4142137
  %v563 = vmul.f32 %v539, 2.4142137
  %v564 = vmul.f32 %v540, 2.4142137
  %v565 = vmul.f32 %v541, 2.4142137
  %vm566 = vcmp.gt.f32.partialorder %v542, %v560
  %vm567 = vcmp.gt.f32.partialorder %v543, %v561
  %vm568 = vcmp.gt.f32.partialorder %v544, %v562
  %vm569 = vcmp.gt.f32.partialorder %v545, %v563
  %vm570 = vcmp.gt.f32.partialorder %v546, %v564
  %vm571 = vcmp.gt.f32.partialorder %v547, %v565
  %vm572 = vmxor %vm554, 1
  %vm573 = vmxor %vm555, 1
  %vm574 = vmxor %vm556, 1
  %vm575 = vmxor %vm557, 1
  %vm576 = vmxor %vm558, 1
  %vm577 = vmxor %vm559, 1
  %vm578 = vmxor %vm566, 1
  %vm579 = vmxor %vm567, 1
  %vm580 = vmxor %vm568, 1
  %vm581 = vmxor %vm569, 1
  %vm582 = vmxor %vm570, 1
  %vm583 = vmxor %vm571, 1
  %vm584 = vmand %vm572, %vm578
  %vm585 = vmand %vm573, %vm579
  %vm586 = vmand %vm574, %vm580
  %vm587 = vmand %vm575, %vm581
  %vm588 = vmand %vm576, %vm582
  %vm589 = vmand %vm577, %vm583
  %v590 = vmul.f32 %v452, %v506
  %v591 = vmul.f32 %v453, %v507
  %v592 = vmul.f32 %v454, %v508
  %v593 = vmul.f32 %v455, %v509
  %v594 = vmul.f32 %v456, %v510
  %v595 = vmul.f32 %v457, %v511
  %vm596 = vcmp.gt.f32.partialorder %v590, 0.0
  %vm597 = vcmp.gt.f32.partialorder %v591, 0.0
  %vm598 = vcmp.gt.f32.partialorder %v592, 0.0
  %vm599 = vcmp.gt.f32.partialorder %v593, 0.0
  %vm600 = vcmp.gt.f32.partialorder %v594, 0.0
  %vm601 = vcmp.gt.f32.partialorder %v595, 0.0
  %vm602 = vmand %vm584, %vm596
  %vm603 = vmand %vm585, %vm597
  %vm604 = vmand %vm586, %vm598
  %vm605 = vmand %vm587, %vm599
  %vm606 = vmand %vm588, %vm600
  %vm607 = vmand %vm589, %vm601
  %v614 = vrot.slane %v530, 7
  %v615 = vrot.slane %v531, 7
  %v616 = vrot.slane %v532, 7
  %v617 = vsel %vm113, %v614, %v616
  %v618 = vrot.slane %v533, 7
  %v619 = vsel %vm113, %v615, %v618
  %v620 = vrot.slane %v534, 7
  %v621 = vsel %vm113, %v616, %v620
  %v622 = vrot.slane %v535, 7
  %v623 = vsel %vm113, %v618, %v622
  %v630 = vsel %vm113, 0.0, %v614
  %v631 = vsel %vm113, 0.0, %v615
  %v632 = vrot.slane %v530, 1
  %v633 = vrot.slane %v532, 1
  %v634 = vsel %vm132, %v632, %v633
  %v635 = vrot.slane %v531, 1
  %v636 = vrot.slane %v533, 1
  %v637 = vsel %vm132, %v635, %v636
  %v638 = vrot.slane %v534, 1
  %v639 = vsel %vm132, %v633, %v638
  %v640 = vrot.slane %v535, 1
  %v641 = vsel %vm132, %v636, %v640
  %v648 = vsel %vm149, %v638, 0.0
  %v649 = vsel %vm149, %v640, 0.0
  %650 = vrot.lane.b32.xlu0 %v530, 1
  %v651 = vpop.permute.xlu0 %650
  %652 = vrot.lane.b32.xlu0 %v532, 1
  %v653 = vpop.permute.xlu0 %652
  %654 = vrot.lane.b32.xlu0 %v534, 1
  %v655 = vpop.permute.xlu0 %654
  %656 = vrot.lane.b32.xlu0 %v531, 1
  %v657 = vpop.permute.xlu0 %656
  %658 = vrot.lane.b32.xlu0 %v533, 1
  %v659 = vpop.permute.xlu0 %658
  %660 = vrot.lane.b32.xlu0 %v535, 1
  %v661 = vpop.permute.xlu0 %660
  %v662 = vsel %vm244, %v651, %v657
  %v663 = vsel %vm244, %v653, %v659
  %v664 = vsel %vm244, %v655, %v661
  %v665 = vsel %vm244, %v657, %v651
  %v666 = vsel %vm244, %v659, %v653
  %v667 = vsel %vm244, %v661, %v655
  %668 = vrot.lane.b32.xlu0 %v634, 1
  %v669 = vpop.permute.xlu0 %668
  %670 = vrot.lane.b32.xlu0 %v639, 1
  %v671 = vpop.permute.xlu0 %670
  %672 = vrot.lane.b32.xlu0 %v648, 1
  %v673 = vpop.permute.xlu0 %672
  %674 = vrot.lane.b32.xlu0 %v637, 1
  %v675 = vpop.permute.xlu0 %674
  %676 = vrot.lane.b32.xlu0 %v641, 1
  %v677 = vpop.permute.xlu0 %676
  %678 = vrot.lane.b32.xlu0 %v649, 1
  %v679 = vpop.permute.xlu0 %678
  %v680 = vsel %vm244, %v669, %v675
  %v681 = vsel %vm244, %v671, %v677
  %v682 = vsel %vm244, %v673, %v679
  %v683 = vsel %vm244, %v675, %v669
  %v684 = vsel %vm244, %v677, %v671
  %v685 = vsel %vm244, %v679, %v673
  %686 = vrot.lane.b32.xlu0 %v630, 1
  %v687 = vpop.permute.xlu0 %686
  %688 = vrot.lane.b32.xlu0 %v617, 1
  %v689 = vpop.permute.xlu0 %688
  %690 = vrot.lane.b32.xlu0 %v621, 1
  %v691 = vpop.permute.xlu0 %690
  %692 = vrot.lane.b32.xlu0 %v631, 1
  %v693 = vpop.permute.xlu0 %692
  %694 = vrot.lane.b32.xlu0 %v619, 1
  %v695 = vpop.permute.xlu0 %694
  %696 = vrot.lane.b32.xlu0 %v623, 1
  %v697 = vpop.permute.xlu0 %696
  %v698 = vsel %vm244, %v687, %v693
  %v699 = vsel %vm244, %v689, %v695
  %v700 = vsel %vm244, %v691, %v697
  %v701 = vsel %vm244, %v693, %v687
  %v702 = vsel %vm244, %v695, %v689
  %v703 = vsel %vm244, %v697, %v691
  %v704 = vsel %vm602, %v683, %v701
  %v705 = vsel %vm603, %v680, %v698
  %v706 = vsel %vm604, %v684, %v702
  %v707 = vsel %vm605, %v681, %v699
  %v708 = vsel %vm606, %v685, %v703
  %v709 = vsel %vm607, %v682, %v700
  %v710 = vsel %vm566, %v630, %v704
  %v711 = vsel %vm567, %v631, %v705
  %v712 = vsel %vm568, %v617, %v706
  %v713 = vsel %vm569, %v619, %v707
  %v714 = vsel %vm570, %v621, %v708
  %v715 = vsel %vm571, %v623, %v709
  %v716 = vsel %vm554, %v665, %v710
  %v717 = vsel %vm555, %v662, %v711
  %v718 = vsel %vm556, %v666, %v712
  %v719 = vsel %vm557, %v663, %v713
  %v720 = vsel %vm558, %v667, %v714
  %v721 = vsel %vm559, %v664, %v715
  %722 = vrot.lane.b32.xlu0 %v530, 127
  %v723 = vpop.permute.xlu0 %722
  %724 = vrot.lane.b32.xlu0 %v532, 127
  %v725 = vpop.permute.xlu0 %724
  %726 = vrot.lane.b32.xlu0 %v534, 127
  %v727 = vpop.permute.xlu0 %726
  %728 = vrot.lane.b32.xlu0 %v531, 127
  %v729 = vpop.permute.xlu0 %728
  %730 = vrot.lane.b32.xlu0 %v533, 127
  %v731 = vpop.permute.xlu0 %730
  %732 = vrot.lane.b32.xlu0 %v535, 127
  %v733 = vpop.permute.xlu0 %732
  %v734 = vsel %vm263, %v723, %v729
  %v735 = vsel %vm263, %v725, %v731
  %v736 = vsel %vm263, %v727, %v733
  %v737 = vsel %vm263, %v729, %v723
  %v738 = vsel %vm263, %v731, %v725
  %v739 = vsel %vm263, %v733, %v727
  %740 = vrot.lane.b32.xlu0 %v630, 127
  %v741 = vpop.permute.xlu0 %740
  %742 = vrot.lane.b32.xlu0 %v617, 127
  %v743 = vpop.permute.xlu0 %742
  %744 = vrot.lane.b32.xlu0 %v621, 127
  %v745 = vpop.permute.xlu0 %744
  %746 = vrot.lane.b32.xlu0 %v631, 127
  %v747 = vpop.permute.xlu0 %746
  %748 = vrot.lane.b32.xlu0 %v619, 127
  %v749 = vpop.permute.xlu0 %748
  %750 = vrot.lane.b32.xlu0 %v623, 127
  %v751 = vpop.permute.xlu0 %750
  %v752 = vsel %vm263, %v741, %v747
  %v753 = vsel %vm263, %v743, %v749
  %v754 = vsel %vm263, %v745, %v751
  %v755 = vsel %vm263, %v747, %v741
  %v756 = vsel %vm263, %v749, %v743
  %v757 = vsel %vm263, %v751, %v745
  %758 = vrot.lane.b32.xlu0 %v634, 127
  %v759 = vpop.permute.xlu0 %758
  %760 = vrot.lane.b32.xlu0 %v639, 127
  %v761 = vpop.permute.xlu0 %760
  %762 = vrot.lane.b32.xlu0 %v648, 127
  %v763 = vpop.permute.xlu0 %762
  %764 = vrot.lane.b32.xlu0 %v637, 127
  %v765 = vpop.permute.xlu0 %764
  %766 = vrot.lane.b32.xlu0 %v641, 127
  %v767 = vpop.permute.xlu0 %766
  %768 = vrot.lane.b32.xlu0 %v649, 127
  %v769 = vpop.permute.xlu0 %768
  %v770 = vsel %vm263, %v759, %v765
  %v771 = vsel %vm263, %v761, %v767
  %v772 = vsel %vm263, %v763, %v769
  %v773 = vsel %vm263, %v765, %v759
  %v774 = vsel %vm263, %v767, %v761
  %v775 = vsel %vm263, %v769, %v763
  %v776 = vsel %vm602, %v752, %v770
  %v777 = vsel %vm603, %v755, %v773
  %v778 = vsel %vm604, %v753, %v771
  %v779 = vsel %vm605, %v756, %v774
  %v780 = vsel %vm606, %v754, %v772
  %v781 = vsel %vm607, %v757, %v775
  %v782 = vsel %vm566, %v634, %v776
  %v783 = vsel %vm567, %v637, %v777
  %v784 = vsel %vm568, %v639, %v778
  %v785 = vsel %vm569, %v641, %v779
  %v786 = vsel %vm570, %v648, %v780
  %v787 = vsel %vm571, %v649, %v781
  %v788 = vsel %vm554, %v734, %v782
  %v789 = vsel %vm555, %v737, %v783
  %v790 = vsel %vm556, %v735, %v784
  %v791 = vsel %vm557, %v738, %v785
  %v792 = vsel %vm558, %v736, %v786
  %v793 = vsel %vm559, %v739, %v787
  %vm794 = vcmp.ge.f32.partialorder %v530, %v716
  %vm795 = vcmp.ge.f32.partialorder %v531, %v717
  %vm796 = vcmp.ge.f32.partialorder %v532, %v718
  %vm797 = vcmp.ge.f32.partialorder %v533, %v719
  %vm798 = vcmp.ge.f32.partialorder %v534, %v720
  %vm799 = vcmp.ge.f32.partialorder %v535, %v721
  %vm800 = vcmp.ge.f32.partialorder %v530, %v788
  %vm801 = vcmp.ge.f32.partialorder %v531, %v789
  %vm802 = vcmp.ge.f32.partialorder %v532, %v790
  %vm803 = vcmp.ge.f32.partialorder %v533, %v791
  %vm804 = vcmp.ge.f32.partialorder %v534, %v792
  %vm805 = vcmp.ge.f32.partialorder %v535, %v793
  %vm806 = vmand %vm794, %vm800
  %vm807 = vmand %vm795, %vm801
  %vm808 = vmand %vm796, %vm802
  %vm809 = vmand %vm797, %vm803
  %vm810 = vmand %vm798, %vm804
  %vm811 = vmand %vm799, %vm805
  %v812 = vsel %vm806, %v530, 0.0
  %v813 = vsel %vm807, %v531, 0.0
  %v814 = vsel %vm808, %v532, 0.0
  %v815 = vsel %vm809, %v533, 0.0
  %v816 = vsel %vm810, %v534, 0.0
  %v817 = vsel %vm811, %v535, 0.0
  %vm818 = vcmp.ge.f32.partialorder %v812, 0.04
  %vm819 = vcmp.ge.f32.partialorder %v813, 0.04
  %vm820 = vcmp.ge.f32.partialorder %v814, 0.04
  %vm821 = vcmp.ge.f32.partialorder %v815, 0.04
  %vm822 = vcmp.ge.f32.partialorder %v816, 0.04
  %vm823 = vcmp.ge.f32.partialorder %v817, 0.04
  %vm824 = vmand %vm95, %vm818
  %vm825 = vmand %vm96, %vm819
  %vm826 = vmand %vm97, %vm820
  %vm827 = vmand %vm98, %vm821
  %vm828 = vmand %vm99, %vm822
  %vm829 = vmand %vm100, %vm823
  %v830 = vsel %vm824, 1.0, 0.0
  %v831 = vsel %vm825, 1.0, 0.0
  %v832 = vsel %vm826, 1.0, 0.0
  %v833 = vsel %vm827, 1.0, 0.0
  %v834 = vsel %vm828, 1.0, 0.0
  %v835 = vsel %vm829, 1.0, 0.0
  %v842 = vrot.slane %v830, 7
  %v843 = vrot.slane %v831, 7
  %v844 = vrot.slane %v832, 7
  %v845 = vsel %vm113, %v842, %v844
  %v846 = vrot.slane %v833, 7
  %v847 = vsel %vm113, %v843, %v846
  %v848 = vrot.slane %v834, 7
  %v849 = vsel %vm113, %v844, %v848
  %v850 = vrot.slane %v835, 7
  %v851 = vsel %vm113, %v846, %v850
  %v858 = vsel %vm113, 0.0, %v842
  %v859 = vsel %vm113, 0.0, %v843
  %v860 = vrot.slane %v830, 1
  %v861 = vrot.slane %v832, 1
  %v862 = vsel %vm132, %v860, %v861
  %v863 = vrot.slane %v831, 1
  %v864 = vrot.slane %v833, 1
  %v865 = vsel %vm132, %v863, %v864
  %v866 = vrot.slane %v834, 1
  %v867 = vsel %vm132, %v861, %v866
  %v868 = vrot.slane %v835, 1
  %v869 = vsel %vm132, %v864, %v868
  %v876 = vsel %vm149, %v866, 0.0
  %v877 = vsel %vm149, %v868, 0.0
  %v878 = vmax.f32 %v858, %v862
  %v879 = vmax.f32 %v859, %v865
  %v880 = vmax.f32 %v845, %v867
  %v881 = vmax.f32 %v847, %v869
  %v882 = vmax.f32 %v849, %v876
  %v883 = vmax.f32 %v851, %v877
  %884 = vrot.lane.b32.xlu0 %v830, 1
  %v885 = vpop.permute.xlu0 %884
  %886 = vrot.lane.b32.xlu0 %v832, 1
  %v887 = vpop.permute.xlu0 %886
  %888 = vrot.lane.b32.xlu0 %v834, 1
  %v889 = vpop.permute.xlu0 %888
  %890 = vrot.lane.b32.xlu0 %v831, 1
  %v891 = vpop.permute.xlu0 %890
  %892 = vrot.lane.b32.xlu0 %v833, 1
  %v893 = vpop.permute.xlu0 %892
  %894 = vrot.lane.b32.xlu0 %v835, 1
  %v895 = vpop.permute.xlu0 %894
  %v896 = vsel %vm244, %v885, %v891
  %v897 = vsel %vm244, %v887, %v893
  %v898 = vsel %vm244, %v889, %v895
  %v899 = vsel %vm244, %v891, %v885
  %v900 = vsel %vm244, %v893, %v887
  %v901 = vsel %vm244, %v895, %v889
  %v902 = vmax.f32 %v878, %v899
  %v903 = vmax.f32 %v879, %v896
  %v904 = vmax.f32 %v880, %v900
  %v905 = vmax.f32 %v881, %v897
  %v906 = vmax.f32 %v882, %v901
  %v907 = vmax.f32 %v883, %v898
  %908 = vrot.lane.b32.xlu0 %v830, 127
  %v909 = vpop.permute.xlu0 %908
  %910 = vrot.lane.b32.xlu0 %v832, 127
  %v911 = vpop.permute.xlu0 %910
  %912 = vrot.lane.b32.xlu0 %v834, 127
  %v913 = vpop.permute.xlu0 %912
  %914 = vrot.lane.b32.xlu0 %v831, 127
  %v915 = vpop.permute.xlu0 %914
  %916 = vrot.lane.b32.xlu0 %v833, 127
  %v917 = vpop.permute.xlu0 %916
  %918 = vrot.lane.b32.xlu0 %v835, 127
  %v919 = vpop.permute.xlu0 %918
  %v920 = vsel %vm263, %v909, %v915
  %v921 = vsel %vm263, %v911, %v917
  %v922 = vsel %vm263, %v913, %v919
  %v923 = vsel %vm263, %v915, %v909
  %v924 = vsel %vm263, %v917, %v911
  %v925 = vsel %vm263, %v919, %v913
  %v926 = vmax.f32 %v902, %v920
  %v927 = vmax.f32 %v903, %v923
  %v928 = vmax.f32 %v904, %v921
  %v929 = vmax.f32 %v905, %v924
  %v930 = vmax.f32 %v906, %v922
  %v931 = vmax.f32 %v907, %v925
  %932 = vrot.lane.b32.xlu0 %v858, 1
  %v933 = vpop.permute.xlu0 %932
  %934 = vrot.lane.b32.xlu0 %v845, 1
  %v935 = vpop.permute.xlu0 %934
  %936 = vrot.lane.b32.xlu0 %v849, 1
  %v937 = vpop.permute.xlu0 %936
  %938 = vrot.lane.b32.xlu0 %v859, 1
  %v939 = vpop.permute.xlu0 %938
  %940 = vrot.lane.b32.xlu0 %v847, 1
  %v941 = vpop.permute.xlu0 %940
  %942 = vrot.lane.b32.xlu0 %v851, 1
  %v943 = vpop.permute.xlu0 %942
  %v944 = vsel %vm244, %v933, %v939
  %v945 = vsel %vm244, %v935, %v941
  %v946 = vsel %vm244, %v937, %v943
  %v947 = vsel %vm244, %v939, %v933
  %v948 = vsel %vm244, %v941, %v935
  %v949 = vsel %vm244, %v943, %v937
  %v950 = vmax.f32 %v926, %v947
  %v951 = vmax.f32 %v927, %v944
  %v952 = vmax.f32 %v928, %v948
  %v953 = vmax.f32 %v929, %v945
  %v954 = vmax.f32 %v930, %v949
  %v955 = vmax.f32 %v931, %v946
  %956 = vrot.lane.b32.xlu0 %v858, 127
  %v957 = vpop.permute.xlu0 %956
  %958 = vrot.lane.b32.xlu0 %v845, 127
  %v959 = vpop.permute.xlu0 %958
  %960 = vrot.lane.b32.xlu0 %v849, 127
  %v961 = vpop.permute.xlu0 %960
  %962 = vrot.lane.b32.xlu0 %v859, 127
  %v963 = vpop.permute.xlu0 %962
  %964 = vrot.lane.b32.xlu0 %v847, 127
  %v965 = vpop.permute.xlu0 %964
  %966 = vrot.lane.b32.xlu0 %v851, 127
  %v967 = vpop.permute.xlu0 %966
  %v968 = vsel %vm263, %v957, %v963
  %v969 = vsel %vm263, %v959, %v965
  %v970 = vsel %vm263, %v961, %v967
  %v971 = vsel %vm263, %v963, %v957
  %v972 = vsel %vm263, %v965, %v959
  %v973 = vsel %vm263, %v967, %v961
  %v974 = vmax.f32 %v950, %v968
  %v975 = vmax.f32 %v951, %v971
  %v976 = vmax.f32 %v952, %v969
  %v977 = vmax.f32 %v953, %v972
  %v978 = vmax.f32 %v954, %v970
  %v979 = vmax.f32 %v955, %v973
  %980 = vrot.lane.b32.xlu0 %v862, 1
  %v981 = vpop.permute.xlu0 %980
  %982 = vrot.lane.b32.xlu0 %v867, 1
  %v983 = vpop.permute.xlu0 %982
  %984 = vrot.lane.b32.xlu0 %v876, 1
  %v985 = vpop.permute.xlu0 %984
  %986 = vrot.lane.b32.xlu0 %v865, 1
  %v987 = vpop.permute.xlu0 %986
  %988 = vrot.lane.b32.xlu0 %v869, 1
  %v989 = vpop.permute.xlu0 %988
  %990 = vrot.lane.b32.xlu0 %v877, 1
  %v991 = vpop.permute.xlu0 %990
  %v992 = vsel %vm244, %v981, %v987
  %v993 = vsel %vm244, %v983, %v989
  %v994 = vsel %vm244, %v985, %v991
  %v995 = vsel %vm244, %v987, %v981
  %v996 = vsel %vm244, %v989, %v983
  %v997 = vsel %vm244, %v991, %v985
  %v998 = vmax.f32 %v974, %v995
  %v999 = vmax.f32 %v975, %v992
  %v1000 = vmax.f32 %v976, %v996
  %v1001 = vmax.f32 %v977, %v993
  %v1002 = vmax.f32 %v978, %v997
  %v1003 = vmax.f32 %v979, %v994
  %1004 = vrot.lane.b32.xlu0 %v862, 127
  %v1005 = vpop.permute.xlu0 %1004
  %1006 = vrot.lane.b32.xlu0 %v867, 127
  %v1007 = vpop.permute.xlu0 %1006
  %1008 = vrot.lane.b32.xlu0 %v876, 127
  %v1009 = vpop.permute.xlu0 %1008
  %1010 = vrot.lane.b32.xlu0 %v865, 127
  %v1011 = vpop.permute.xlu0 %1010
  %1012 = vrot.lane.b32.xlu0 %v869, 127
  %v1013 = vpop.permute.xlu0 %1012
  %1014 = vrot.lane.b32.xlu0 %v877, 127
  %v1015 = vpop.permute.xlu0 %1014
  %v1016 = vsel %vm263, %v1005, %v1011
  %v1017 = vsel %vm263, %v1007, %v1013
  %v1018 = vsel %vm263, %v1009, %v1015
  %v1019 = vsel %vm263, %v1011, %v1005
  %v1020 = vsel %vm263, %v1013, %v1007
  %v1021 = vsel %vm263, %v1015, %v1009
  %v1022 = vmax.f32 %v998, %v1016
  %v1023 = vmax.f32 %v999, %v1019
  %v1024 = vmax.f32 %v1000, %v1017
  %v1025 = vmax.f32 %v1001, %v1020
  %v1026 = vmax.f32 %v1002, %v1018
  %v1027 = vmax.f32 %v1003, %v1021
  %vm1028 = vcmp.ge.f32.partialorder %v812, 0.01
  %vm1029 = vcmp.ge.f32.partialorder %v813, 0.01
  %vm1030 = vcmp.ge.f32.partialorder %v814, 0.01
  %vm1031 = vcmp.ge.f32.partialorder %v815, 0.01
  %vm1032 = vcmp.ge.f32.partialorder %v816, 0.01
  %vm1033 = vcmp.ge.f32.partialorder %v817, 0.01
  %vm1034 = vmxor %vm818, 1
  %vm1035 = vmxor %vm819, 1
  %vm1036 = vmxor %vm820, 1
  %vm1037 = vmxor %vm821, 1
  %vm1038 = vmxor %vm822, 1
  %vm1039 = vmxor %vm823, 1
  %vm1040 = vmand %vm1028, %vm1034
  %vm1041 = vmand %vm1029, %vm1035
  %vm1042 = vmand %vm1030, %vm1036
  %vm1043 = vmand %vm1031, %vm1037
  %vm1044 = vmand %vm1032, %vm1038
  %vm1045 = vmand %vm1033, %vm1039
  %vm1046 = vcmp.gt.f32.partialorder %v1022, 0.0
  %vm1047 = vcmp.gt.f32.partialorder %v1023, 0.0
  %vm1048 = vcmp.gt.f32.partialorder %v1024, 0.0
  %vm1049 = vcmp.gt.f32.partialorder %v1025, 0.0
  %vm1050 = vcmp.gt.f32.partialorder %v1026, 0.0
  %vm1051 = vcmp.gt.f32.partialorder %v1027, 0.0
  %vm1052 = vmand %vm1040, %vm1046
  %vm1053 = vmand %vm1041, %vm1047
  %vm1054 = vmand %vm1042, %vm1048
  %vm1055 = vmand %vm1043, %vm1049
  %vm1056 = vmand %vm1044, %vm1050
  %vm1057 = vmand %vm1045, %vm1051
  %vm1058 = vmor %vm818, %vm1052
  %vm1059 = vmor %vm819, %vm1053
  %vm1060 = vmor %vm820, %vm1054
  %vm1061 = vmor %vm821, %vm1055
  %vm1062 = vmor %vm822, %vm1056
  %vm1063 = vmor %vm823, %vm1057
  %v1064 = vsel %vm1058, 1.0, 0.0
  %v1065 = vsel %vm1059, 1.0, 0.0
  %v1066 = vsel %vm1060, 1.0, 0.0
  %v1067 = vsel %vm1061, 1.0, 0.0
  %v1068 = vsel %vm1062, 1.0, 0.0
  %v1069 = vsel %vm1063, 1.0, 0.0
  %v1076 = vrot.slane %v1064, 2
  %v1077 = vrot.slane %v1066, 2
  %v1078 = vsel %vm189, %v1076, %v1077
  %v1079 = vrot.slane %v1065, 2
  %v1080 = vrot.slane %v1067, 2
  %v1081 = vsel %vm189, %v1079, %v1080
  %v1082 = vrot.slane %v1068, 2
  %v1083 = vsel %vm189, %v1077, %v1082
  %v1084 = vrot.slane %v1069, 2
  %v1085 = vsel %vm189, %v1080, %v1084
  %1090 = vst [vmem:[%s1] sm:$0xff] %v1078
  %1091 = vst [vmem:[%s1 + $0x8] sm:$0xff] %v1081
  %1092 = vst [vmem:[%s1 + $0x10] sm:$0xff] %v1083
  %1093 = vst [vmem:[%s1 + $0x18] sm:$0xff] %v1085
  // Predicated region
  $region6: #{canny_edge_detector.1} parent=0 // pred_check
    _
  $region7: #{canny_edge_detector.1} parent=0 // pred_check_branch
    %1095 = sbr.rel (0) target = $region9
  $region8: #{canny_edge_detector.1} parent=0 // pred_region
    _
  $region9: #{canny_edge_detector.1} parent=0 // pred_fallthru
    _
  // Predicated region
  $region10: #{canny_edge_detector.1} parent=0 // pred_check
    _
  $region11: #{canny_edge_detector.1} parent=0 // pred_check_branch
    %1097 = sbr.rel (0) target = $region13
  $region12: #{canny_edge_detector.1} parent=0 // pred_region
    _
  $region13: #{canny_edge_detector.1} parent=0 // pred_fallthru
    _

</llo_original>
